<compile_context>
chip_gen: v5e
topology: v5e:2x2
jax: 0.10.0
libtpu: 0.0.40
codegen_flags: <defaults>
</compile_context>

<pallas_src>
import jax
import jax.numpy as jnp
from jax.experimental import pallas as pl
from jax.experimental.pallas import tpu as pltpu

_LANE = 128


def _round_up(x, m=_LANE):
    return ((x + m - 1) // m) * m


def _pad2d(a, rows, cols):
    r, c = a.shape
    return jnp.pad(a, ((0, rows - r), (0, cols - c)))


def proto_kernel(attrs_ref, w1_ref, b1_ref, w2_ref, b2_ref, w3_ref, b3_ref,
                 out_ref):
    """Single-block kernel: all operands VMEM-resident, feature dims lane-padded.

    attrs_ref: [num_classes, A_pad] bf16 (rows unpadded -> stats stay correct)
    w*_ref:    [in_pad, out_pad]    bf16 (pre-transposed: x @ W + b)
    b*_ref:    [1, out_pad]         f32
    out_ref:   [num_classes, P_pad] f32
    """
    n = attrs_ref.shape[0]            # true num_classes
    inv_n = 1.0 / n
    inv_nm1 = 1.0 / (n - 1)           # unbiased variance, matches torch .var()

    def class_standardize(h):
        # Fused single pass over h: sum and sum-of-squares (one sweep over h),
        # then var = (sumsq - n*mean^2)/(n-1).  Reciprocal on the [1, H] row
        # goes to the EUP (approx) instead of an iterative VALU divide.
        s = jnp.sum(h, axis=0, keepdims=True)
        sq = jnp.sum(h * h, axis=0, keepdims=True)
        mean = s * inv_n
        var = (sq - n * (mean * mean)) * inv_nm1
        inv = pl.reciprocal(var + 1e-5, approx=True)
        return (h - mean) * inv

    # fc1 + relu1 (bf16 operands, f32 accumulation; bias add in f32)
    h = jnp.dot(attrs_ref[...], w1_ref[...],
                preferred_element_type=jnp.float32) + b1_ref[...]
    h = jnp.maximum(h, 0.0)

    # fc2
    h = jnp.dot(h.astype(jnp.bfloat16), w2_ref[...],
                preferred_element_type=jnp.float32) + b2_ref[...]

    # cn1 + relu2 + cn2 (all f32)
    h = class_standardize(h)
    h = jnp.maximum(h, 0.0)
    h = class_standardize(h)

    # fc3 + relu3
    out = jnp.dot(h.astype(jnp.bfloat16), w3_ref[...],
                  preferred_element_type=jnp.float32) + b3_ref[...]
    out_ref[...] = jnp.maximum(out, 0.0)


def prepare_params(params):
    """One-time: zero-pad feature dims to multiples of 128, cast weights bf16."""
    attr_dim, hid_dim = params["w1"].shape
    proto_dim = params["w3"].shape[1]
    A, H, P = _round_up(attr_dim), _round_up(hid_dim), _round_up(proto_dim)
    return {
        "w1": _pad2d(params["w1"], A, H).astype(jnp.bfloat16),
        "b1": _pad2d(params["b1"], 1, H).astype(jnp.float32),
        "w2": _pad2d(params["w2"], H, H).astype(jnp.bfloat16),
        "b2": _pad2d(params["b2"], 1, H).astype(jnp.float32),
        "w3": _pad2d(params["w3"], H, P).astype(jnp.bfloat16),
        "b3": _pad2d(params["b3"], 1, P).astype(jnp.float32),
    }


def proto_model_forward(attrs, padded_params, proto_dim):
    """attrs: [num_classes, attr_dim] f32. Returns [num_classes, proto_dim] f32."""
    num_classes, _ = attrs.shape
    if num_classes < 2:
        # torch var(dim=0, unbiased=True) divides by (n-1): undefined for n == 1.
        raise ValueError("ClassStandardization needs num_classes >= 2.")
    A = padded_params["w1"].shape[0]
    P = padded_params["w3"].shape[1]

    # Pad columns only (rows untouched so CS statistics are exact); bf16 halves DMA.
    attrs_p = _pad2d(attrs, num_classes, A).astype(jnp.bfloat16)

    out_padded = pl.pallas_call(
        proto_kernel,
        out_shape=jax.ShapeDtypeStruct((num_classes, P), jnp.float32),
        in_specs=[pl.BlockSpec(memory_space=pltpu.VMEM)] * 7,
        out_specs=pl.BlockSpec(memory_space=pltpu.VMEM),
    )(attrs_p, padded_params["w1"], padded_params["b1"],
      padded_params["w2"], padded_params["b2"],
      padded_params["w3"], padded_params["b3"])

    return out_padded[:, :proto_dim]


def init_params(key, attr_dim, hid_dim, proto_dim):
    """Deterministic init mirroring ProtoModel.__init__ shapes/schemes (f32, unpadded)."""
    k1, k2, k3, k3b = jax.random.split(key, 4)

    def xavier_uniform(k, fan_in, fan_out):
        limit = jnp.sqrt(6.0 / (fan_in + fan_out))
        # stored as [in_dim, out_dim] (transposed vs torch's [out, in])
        return jax.random.uniform(k, (fan_in, fan_out), jnp.float32, -limit, limit)

    w1 = xavier_uniform(k1, attr_dim, hid_dim)
    b1 = jnp.zeros((1, hid_dim), jnp.float32)
    w2 = xavier_uniform(k2, hid_dim, hid_dim)
    b2 = jnp.zeros((1, hid_dim), jnp.float32)

    # fc3: USE_PROPER_INIT uniform(-b, b), b = sqrt(3 / (hid_dim * proto_dim))
    b = jnp.sqrt(3.0 / (hid_dim * proto_dim))
    w3 = jax.random.uniform(k3, (hid_dim, proto_dim), jnp.float32, -b, b)
    # fc3 bias keeps PyTorch Linear default: U(-1/sqrt(fan_in), 1/sqrt(fan_in))
    bb = 1.0 / jnp.sqrt(float(hid_dim))
    b3 = jax.random.uniform(k3b, (1, proto_dim), jnp.float32, -bb, bb)

    return {"w1": w1, "b1": b1, "w2": w2, "b2": b2, "w3": w3, "b3": b3}


def proto_model_reference_f32(attrs, params):
    """Pure-f32 JAX reference matching the PyTorch module exactly."""
    n = attrs.shape[0]

    def cs(h):
        m = h.mean(axis=0, keepdims=True)
        v = ((h - m) ** 2).sum(axis=0, keepdims=True) / (n - 1)
        return (h - m) / (v + 1e-5)

    h = jnp.maximum(attrs @ params["w1"] + params["b1"], 0.0)
    h = h @ params["w2"] + params["b2"]
    h = jnp.maximum(cs(h), 0.0)
    h = cs(h)
    return jnp.maximum(h @ params["w3"] + params["b3"], 0.0)


def proto_model_reference_bf16(attrs, params):
    """Reference mirroring the kernel's precision choices (bf16 matmul operands,
    f32 accumulation / standardization, exact division) for a tight check."""
    n = attrs.shape[0]

    def dot(a, b):
        return jnp.dot(a.astype(jnp.bfloat16), b.astype(jnp.bfloat16),
                       preferred_element_type=jnp.float32)

    def cs(h):
        m = h.mean(axis=0, keepdims=True)
        v = ((h - m) ** 2).sum(axis=0, keepdims=True) / (n - 1)
        return (h - m) / (v + 1e-5)

    h = jnp.maximum(dot(attrs, params["w1"]) + params["b1"], 0.0)
    h = dot(h, params["w2"]) + params["b2"]
    h = jnp.maximum(cs(h), 0.0)
    h = cs(h)
    return jnp.maximum(dot(h, params["w3"]) + params["b3"], 0.0)


if __name__ == "__main__":
    num_classes = 16   # number of class attribute vectors (rows; never padded)
    attr_dim = 32
    hid_dim = 32
    proto_dim = 32

    key = jax.random.PRNGKey(0)
    k_attrs, k_params = jax.random.split(key)

    attrs = jax.random.normal(k_attrs, (num_classes, attr_dim), jnp.float32)
    params = init_params(k_params, attr_dim, hid_dim, proto_dim)
    padded = prepare_params(params)

    out = proto_model_forward(attrs, padded, proto_dim)
    out = jax.block_until_ready(out)
    assert out.shape == (num_classes, proto_dim)

    # Tight check vs. a reference mirroring the kernel's precision (remaining
    # deltas: approx reciprocal + fused-variance formula only).
    ref_bf16 = proto_model_reference_bf16(attrs, params)
    assert jnp.allclose(out, ref_bf16, atol=1e-2, rtol=1e-2), \
        "mismatch vs bf16-precision reference"

    # Loose check vs. the exact-f32 PyTorch-semantics reference (differences are
    # bf16 rounding of matmul operands, which the perf review accepted).
    ref_f32 = proto_model_reference_f32(attrs, params)
    assert jnp.allclose(out, ref_f32, atol=1e-1, rtol=1e-1), \
        "mismatch vs f32 reference"

    print("KERNEL_OK")
</pallas_src>

<mosaic_0001>
module attributes {stable_mosaic.version = 11 : i64} {
  func.func @proto_kernel(%arg0: memref<16x128xbf16, #tpu.memory_space<vmem>>, %arg1: memref<128x128xbf16, #tpu.memory_space<vmem>>, %arg2: memref<1x128xf32, #tpu.memory_space<vmem>>, %arg3: memref<128x128xbf16, #tpu.memory_space<vmem>>, %arg4: memref<1x128xf32, #tpu.memory_space<vmem>>, %arg5: memref<128x128xbf16, #tpu.memory_space<vmem>>, %arg6: memref<1x128xf32, #tpu.memory_space<vmem>>, %arg7: memref<16x128xf32, #tpu.memory_space<vmem>>) attributes {dimension_semantics = [], scalar_prefetch = 0 : i64, scratch_operands = 0 : i64, tpu.core_type = #tpu.core_type<tc>} {
    %c0 = arith.constant 0 : index
    %c0_0 = arith.constant 0 : index
    %0 = vector.load %arg0[%c0, %c0_0] : memref<16x128xbf16, #tpu.memory_space<vmem>>, vector<16x128xbf16>
    %c0_1 = arith.constant 0 : index
    %c0_2 = arith.constant 0 : index
    %1 = vector.load %arg1[%c0_1, %c0_2] : memref<128x128xbf16, #tpu.memory_space<vmem>>, vector<128x128xbf16>
    %cst = arith.constant dense<0.000000e+00> : vector<16x128xf32>
    %2 = tpu.matmul %0, %1, %cst {dimension_numbers = #tpu.dot_dimension_numbers<[1], [0], [0], [1], [0, 0, 1, 1], [], []>} : vector<16x128xbf16>, vector<128x128xbf16>, vector<16x128xf32> -> vector<16x128xf32>
    %c0_3 = arith.constant 0 : index
    %c0_4 = arith.constant 0 : index
    %3 = vector.load %arg2[%c0_3, %c0_4] : memref<1x128xf32, #tpu.memory_space<vmem>>, vector<1x128xf32>
    %4 = vector.broadcast %3 : vector<1x128xf32> to vector<16x128xf32>
    %5 = arith.addf %2, %4 : vector<16x128xf32>
    %cst_5 = arith.constant 0.000000e+00 : f32
    %6 = vector.broadcast %cst_5 : f32 to vector<16x128xf32>
    %7 = arith.maximumf %5, %6 : vector<16x128xf32>
    %8 = arith.truncf %7 : vector<16x128xf32> to vector<16x128xbf16>
    %c0_6 = arith.constant 0 : index
    %c0_7 = arith.constant 0 : index
    %9 = vector.load %arg3[%c0_6, %c0_7] : memref<128x128xbf16, #tpu.memory_space<vmem>>, vector<128x128xbf16>
    %cst_8 = arith.constant dense<0.000000e+00> : vector<16x128xf32>
    %10 = tpu.matmul %8, %9, %cst_8 {dimension_numbers = #tpu.dot_dimension_numbers<[1], [0], [0], [1], [0, 0, 1, 1], [], []>} : vector<16x128xbf16>, vector<128x128xbf16>, vector<16x128xf32> -> vector<16x128xf32>
    %c0_9 = arith.constant 0 : index
    %c0_10 = arith.constant 0 : index
    %11 = vector.load %arg4[%c0_9, %c0_10] : memref<1x128xf32, #tpu.memory_space<vmem>>, vector<1x128xf32>
    %12 = vector.broadcast %11 : vector<1x128xf32> to vector<16x128xf32>
    %13 = arith.addf %10, %12 : vector<16x128xf32>
    %cst_11 = arith.constant dense<0.000000e+00> : vector<128xf32>
    %14 = vector.multi_reduction <add>, %13, %cst_11 [0] : vector<16x128xf32> to vector<128xf32>
    %15 = vector.shape_cast %14 : vector<128xf32> to vector<1x128xf32>
    %16 = arith.mulf %13, %13 : vector<16x128xf32>
    %cst_12 = arith.constant dense<0.000000e+00> : vector<128xf32>
    %17 = vector.multi_reduction <add>, %16, %cst_12 [0] : vector<16x128xf32> to vector<128xf32>
    %18 = vector.shape_cast %17 : vector<128xf32> to vector<1x128xf32>
    %cst_13 = arith.constant 6.250000e-02 : f32
    %19 = vector.broadcast %cst_13 : f32 to vector<1x128xf32>
    %20 = arith.mulf %15, %19 : vector<1x128xf32>
    %21 = arith.mulf %20, %20 : vector<1x128xf32>
    %cst_14 = arith.constant 1.600000e+01 : f32
    %22 = vector.broadcast %cst_14 : f32 to vector<1x128xf32>
    %23 = arith.mulf %22, %21 : vector<1x128xf32>
    %24 = arith.subf %18, %23 : vector<1x128xf32>
    %cst_15 = arith.constant 0.0666666701 : f32
    %25 = vector.broadcast %cst_15 : f32 to vector<1x128xf32>
    %26 = arith.mulf %24, %25 : vector<1x128xf32>
    %cst_16 = arith.constant 9.99999974E-6 : f32
    %27 = vector.broadcast %cst_16 : f32 to vector<1x128xf32>
    %28 = arith.addf %26, %27 : vector<1x128xf32>
    %29 = tpu.reciprocal %28 {approx = true} : vector<1x128xf32> -> vector<1x128xf32>
    %30 = vector.broadcast %20 : vector<1x128xf32> to vector<16x128xf32>
    %31 = arith.subf %13, %30 : vector<16x128xf32>
    %32 = vector.broadcast %29 : vector<1x128xf32> to vector<16x128xf32>
    %33 = arith.mulf %31, %32 : vector<16x128xf32>
    %cst_17 = arith.constant 0.000000e+00 : f32
    %34 = vector.broadcast %cst_17 : f32 to vector<16x128xf32>
    %35 = arith.maximumf %33, %34 : vector<16x128xf32>
    %cst_18 = arith.constant dense<0.000000e+00> : vector<128xf32>
    %36 = vector.multi_reduction <add>, %35, %cst_18 [0] : vector<16x128xf32> to vector<128xf32>
    %37 = vector.shape_cast %36 : vector<128xf32> to vector<1x128xf32>
    %38 = arith.mulf %35, %35 : vector<16x128xf32>
    %cst_19 = arith.constant dense<0.000000e+00> : vector<128xf32>
    %39 = vector.multi_reduction <add>, %38, %cst_19 [0] : vector<16x128xf32> to vector<128xf32>
    %40 = vector.shape_cast %39 : vector<128xf32> to vector<1x128xf32>
    %cst_20 = arith.constant 6.250000e-02 : f32
    %41 = vector.broadcast %cst_20 : f32 to vector<1x128xf32>
    %42 = arith.mulf %37, %41 : vector<1x128xf32>
    %43 = arith.mulf %42, %42 : vector<1x128xf32>
    %cst_21 = arith.constant 1.600000e+01 : f32
    %44 = vector.broadcast %cst_21 : f32 to vector<1x128xf32>
    %45 = arith.mulf %44, %43 : vector<1x128xf32>
    %46 = arith.subf %40, %45 : vector<1x128xf32>
    %cst_22 = arith.constant 0.0666666701 : f32
    %47 = vector.broadcast %cst_22 : f32 to vector<1x128xf32>
    %48 = arith.mulf %46, %47 : vector<1x128xf32>
    %cst_23 = arith.constant 9.99999974E-6 : f32
    %49 = vector.broadcast %cst_23 : f32 to vector<1x128xf32>
    %50 = arith.addf %48, %49 : vector<1x128xf32>
    %51 = tpu.reciprocal %50 {approx = true} : vector<1x128xf32> -> vector<1x128xf32>
    %52 = vector.broadcast %42 : vector<1x128xf32> to vector<16x128xf32>
    %53 = arith.subf %35, %52 : vector<16x128xf32>
    %54 = vector.broadcast %51 : vector<1x128xf32> to vector<16x128xf32>
    %55 = arith.mulf %53, %54 : vector<16x128xf32>
    %56 = arith.truncf %55 : vector<16x128xf32> to vector<16x128xbf16>
    %c0_24 = arith.constant 0 : index
    %c0_25 = arith.constant 0 : index
    %57 = vector.load %arg5[%c0_24, %c0_25] : memref<128x128xbf16, #tpu.memory_space<vmem>>, vector<128x128xbf16>
    %cst_26 = arith.constant dense<0.000000e+00> : vector<16x128xf32>
    %58 = tpu.matmul %56, %57, %cst_26 {dimension_numbers = #tpu.dot_dimension_numbers<[1], [0], [0], [1], [0, 0, 1, 1], [], []>} : vector<16x128xbf16>, vector<128x128xbf16>, vector<16x128xf32> -> vector<16x128xf32>
    %c0_27 = arith.constant 0 : index
    %c0_28 = arith.constant 0 : index
    %59 = vector.load %arg6[%c0_27, %c0_28] : memref<1x128xf32, #tpu.memory_space<vmem>>, vector<1x128xf32>
    %60 = vector.broadcast %59 : vector<1x128xf32> to vector<16x128xf32>
    %61 = arith.addf %58, %60 : vector<16x128xf32>
    %cst_29 = arith.constant 0.000000e+00 : f32
    %62 = vector.broadcast %cst_29 : f32 to vector<16x128xf32>
    %63 = arith.maximumf %61, %62 : vector<16x128xf32>
    %c0_30 = arith.constant 0 : index
    %c0_31 = arith.constant 0 : index
    %64 = vector.load %arg7[%c0_30, %c0_31] : memref<16x128xf32, #tpu.memory_space<vmem>>, vector<16x128xf32>
    tpu.vector_store %arg7[%c0_30, %c0_31], %63 {strides = array<i32>} : memref<16x128xf32, #tpu.memory_space<vmem>>, vector<16x128xf32>,
    return
  }
}

</mosaic_0001>

<llo_original>
// kernel: tpu_custom_call.1
$region0: #{tpu_custom_call.1}
  #allocation0 [shape = 'u32[]', space=smem, size = 0x4, offset = 0x4, fixed_abs, tag = 'smem constant byte address 0x4 - core index']
  #allocation1 [shape = 'u32[72,128]{1,0:T(1,128)}', space=vmem, size = 0x9000, scoped, tag = 'internal scratch']
  %s0 = inlined_call_operand.hbm [shape: bf16[16,128], index: 0, kind: input, shape index: {}]
  %s1 = inlined_call_operand.hbm [shape: bf16[128,128], index: 1, kind: input, shape index: {}]
  %s2 = inlined_call_operand.vmem [shape: f32[1,128], index: 2, kind: input, shape index: {}]
  %s3 = inlined_call_operand.hbm [shape: bf16[128,128], index: 3, kind: input, shape index: {}]
  %s4 = inlined_call_operand.vmem [shape: f32[1,128], index: 4, kind: input, shape index: {}]
  %s5 = inlined_call_operand.hbm [shape: bf16[128,128], index: 5, kind: input, shape index: {}]
  %s6 = inlined_call_operand.vmem [shape: f32[1,128], index: 6, kind: input, shape index: {}]
  %s7 = inlined_call_operand.hbm [shape: f32[16,128], index: 7, kind: output, shape index: {}]
  %s8 = sld [smem:[#allocation0]]
  $region54: #{tpu_custom_call.1} parent=0
    _
  %s10 = ssub.s32 1, %s8
  %s11 = scalar_select 0, %s10, %s8
  $region1: #{tpu_custom_call.1} parent=0
    #allocation2 [shape = 'u8[4096]{0}', space=vmem, size = 0x1000, scoped, tag = 'input window, operand 0, single buffered']
    #allocation3 [shape = 's32[1]{0}', space=sflag, size = 0x4, scoped, tag = 'scoped memory for tpu_custom_call.1']
    #allocation4 [shape = 's32[1]{0}', space=sflag, size = 0x4, scoped, tag = 'scoped memory for tpu_custom_call.1']
    #allocation5 [shape = 'u8[32768]{0}', space=vmem, size = 0x8000, scoped, tag = 'input window, operand 1, single buffered']
    #allocation6 [shape = 's32[1]{0}', space=sflag, size = 0x4, scoped, tag = 'scoped memory for tpu_custom_call.1']
    #allocation7 [shape = 'u8[32768]{0}', space=vmem, size = 0x8000, scoped, tag = 'input window, operand 3, single buffered']
    #allocation8 [shape = 'u8[32768]{0}', space=vmem, size = 0x8000, scoped, tag = 'input window, operand 5, single buffered']
    #allocation9 [shape = 's32[1]{0}', space=sflag, size = 0x4, scoped, tag = 'scoped memory for tpu_custom_call.1']
    #allocation10 [shape = 'u8[8192]{0}', space=vmem, size = 0x2000, scoped, tag = 'output window, operand 0, single buffered']
    %12 = vsyncpa [#allocation3], 0
    %13 = vsyncpa [#allocation6], 0
    %14 = vsyncpa [#allocation9], 0
    %15 = vsyncpa [#allocation4], 0
    // Predicated region
    $region2: #{tpu_custom_call.1} parent=1 // pred_check
      _
    $region3: #{tpu_custom_call.1} parent=1 // pred_check_branch
      %17 = sbr.rel (0) target = $region5
    $region4: #{tpu_custom_call.1} parent=1 // pred_region
      %19 = vsyncadd [#allocation3], 0
      %s20 = sshll.u32 %s0, 4
      %s21 = int_to_ptr.hbm [resolvable:$true] %s20
      %s22 = sshll.u32 [#allocation2], 4
      %s23 = int_to_ptr.vmem [resolvable:$true] %s22
      %28 = dma.hbm_to_vmem [thread:$0]  %s21, 128, %s23, [#allocation3], 64, 64, 4
    $region5: #{tpu_custom_call.1} parent=1 // pred_fallthru
      _
    // Predicated region
    $region6: #{tpu_custom_call.1} parent=1 // pred_check
      _
    $region7: #{tpu_custom_call.1} parent=1 // pred_check_branch
      %30 = sbr.rel (0) target = $region9
    $region8: #{tpu_custom_call.1} parent=1 // pred_region
      %32 = vsyncadd [#allocation6], 0
      %s33 = sshll.u32 %s1, 4
      %s34 = int_to_ptr.hbm [resolvable:$true] %s33
      %s35 = sshll.u32 [#allocation5], 4
      %s36 = int_to_ptr.vmem [resolvable:$true] %s35
      %41 = dma.hbm_to_vmem [thread:$0]  %s34, 1024, %s36, [#allocation6], 64, 64, 4
    $region9: #{tpu_custom_call.1} parent=1 // pred_fallthru
      _
    // Predicated region
    $region10: #{tpu_custom_call.1} parent=1 // pred_check
      _
    $region11: #{tpu_custom_call.1} parent=1 // pred_check_branch
      %43 = sbr.rel (0) target = $region13
    $region12: #{tpu_custom_call.1} parent=1 // pred_region
      _
    $region13: #{tpu_custom_call.1} parent=1 // pred_fallthru
      _
    // Predicated region
    $region14: #{tpu_custom_call.1} parent=1 // pred_check
      _
    $region15: #{tpu_custom_call.1} parent=1 // pred_check_branch
      %45 = sbr.rel (0) target = $region17
    $region16: #{tpu_custom_call.1} parent=1 // pred_region
      %47 = vsyncadd [#allocation6], 0
      %s48 = sshll.u32 %s3, 4
      %s49 = int_to_ptr.hbm [resolvable:$true] %s48
      %s50 = sshll.u32 [#allocation7], 4
      %s51 = int_to_ptr.vmem [resolvable:$true] %s50
      %56 = dma.hbm_to_vmem [thread:$0]  %s49, 1024, %s51, [#allocation6], 64, 64, 4
    $region17: #{tpu_custom_call.1} parent=1 // pred_fallthru
      _
    // Predicated region
    $region18: #{tpu_custom_call.1} parent=1 // pred_check
      _
    $region19: #{tpu_custom_call.1} parent=1 // pred_check_branch
      %58 = sbr.rel (0) target = $region21
    $region20: #{tpu_custom_call.1} parent=1 // pred_region
      _
    $region21: #{tpu_custom_call.1} parent=1 // pred_fallthru
      _
    // Predicated region
    $region22: #{tpu_custom_call.1} parent=1 // pred_check
      _
    $region23: #{tpu_custom_call.1} parent=1 // pred_check_branch
      %60 = sbr.rel (0) target = $region25
    $region24: #{tpu_custom_call.1} parent=1 // pred_region
      %62 = vsyncadd [#allocation9], 0
      %s63 = sshll.u32 %s5, 4
      %s64 = int_to_ptr.hbm [resolvable:$true] %s63
      %s65 = sshll.u32 [#allocation8], 4
      %s66 = int_to_ptr.vmem [resolvable:$true] %s65
      %71 = dma.hbm_to_vmem [thread:$0]  %s64, 1024, %s66, [#allocation9], 64, 64, 4
    $region25: #{tpu_custom_call.1} parent=1 // pred_fallthru
      _
    // Predicated region
    $region26: #{tpu_custom_call.1} parent=1 // pred_check
      _
    $region27: #{tpu_custom_call.1} parent=1 // pred_check_branch
      %73 = sbr.rel (0) target = $region29
    $region28: #{tpu_custom_call.1} parent=1 // pred_region
      _
    $region29: #{tpu_custom_call.1} parent=1 // pred_fallthru
      _
    // Predicated region
    $region30: #{tpu_custom_call.1} parent=1 // pred_check
      _
    $region31: #{tpu_custom_call.1} parent=1 // pred_check_branch
      %75 = sbr.rel (0) target = $region33
    $region32: #{tpu_custom_call.1} parent=1 // pred_region
      %77 = dma.done [#allocation3], 128
    $region33: #{tpu_custom_call.1} parent=1 // pred_fallthru
      _
    // Predicated region
    $region34: #{tpu_custom_call.1} parent=1 // pred_check
      _
    $region35: #{tpu_custom_call.1} parent=1 // pred_check_branch
      %79 = sbr.rel (0) target = $region37
    $region36: #{tpu_custom_call.1} parent=1 // pred_region
      %81 = dma.done [#allocation6], 1024
    $region37: #{tpu_custom_call.1} parent=1 // pred_fallthru
      _
    // Predicated region
    $region38: #{tpu_custom_call.1} parent=1 // pred_check
      _
    $region39: #{tpu_custom_call.1} parent=1 // pred_check_branch
      %83 = sbr.rel (0) target = $region41
    $region40: #{tpu_custom_call.1} parent=1 // pred_region
      %85 = dma.done [#allocation6], 1024
    $region41: #{tpu_custom_call.1} parent=1 // pred_fallthru
      _
    // Predicated region
    $region42: #{tpu_custom_call.1} parent=1 // pred_check
      _
    $region43: #{tpu_custom_call.1} parent=1 // pred_check_branch
      %87 = sbr.rel (0) target = $region45
    $region44: #{tpu_custom_call.1} parent=1 // pred_region
      %89 = dma.done [#allocation9], 1024
    $region45: #{tpu_custom_call.1} parent=1 // pred_fallthru
      _
    %v90 = vld [vmem:[#allocation2] sm:$0xf]
    %v91 = vld [vmem:[#allocation2 + $0x4] sm:$0xf]
    %v92 = vld [vmem:[#allocation5] sm:$0xf]
    %v93 = vld [vmem:[#allocation5 + $0x4] sm:$0xf]
    %v94 = vld [vmem:[#allocation5 + $0x8] sm:$0xf]
    %v95 = vld [vmem:[#allocation5 + $0xc] sm:$0xf]
    %v96 = vld [vmem:[#allocation5 + $0x10] sm:$0xf]
    %v97 = vld [vmem:[#allocation5 + $0x14] sm:$0xf]
    %v98 = vld [vmem:[#allocation5 + $0x18] sm:$0xf]
    %v99 = vld [vmem:[#allocation5 + $0x1c] sm:$0xf]
    %v100 = vld [vmem:[#allocation5 + $0x20] sm:$0xf]
    %v101 = vld [vmem:[#allocation5 + $0x24] sm:$0xf]
    %v102 = vld [vmem:[#allocation5 + $0x28] sm:$0xf]
    %v103 = vld [vmem:[#allocation5 + $0x2c] sm:$0xf]
    %v104 = vld [vmem:[#allocation5 + $0x30] sm:$0xf]
    %v105 = vld [vmem:[#allocation5 + $0x34] sm:$0xf]
    %v106 = vld [vmem:[#allocation5 + $0x38] sm:$0xf]
    %v107 = vld [vmem:[#allocation5 + $0x3c] sm:$0xf]
    %v108 = vld [vmem:[%s2] sm:$0x1]
    %v110 = vperm.slane %v108, 0
    %v114 = vunpack.c.l.b16 %v90
    %v115 = vunpack.c.l.b16 %v91
    %v116 = vpack.c.b16 %v115, %v114
    %v134 = vunpack.c.l.b16 %v92
    %v135 = vunpack.c.l.b16 %v93
    %v136 = vunpack.c.l.b16 %v94
    %v137 = vunpack.c.l.b16 %v95
    %v138 = vunpack.c.l.b16 %v96
    %v139 = vunpack.c.l.b16 %v97
    %v140 = vunpack.c.l.b16 %v98
    %v141 = vunpack.c.l.b16 %v99
    %v142 = vunpack.c.l.b16 %v100
    %v143 = vunpack.c.l.b16 %v101
    %v144 = vunpack.c.l.b16 %v102
    %v145 = vunpack.c.l.b16 %v103
    %v146 = vunpack.c.l.b16 %v104
    %v147 = vunpack.c.l.b16 %v105
    %v148 = vunpack.c.l.b16 %v106
    %v149 = vunpack.c.l.b16 %v107
    %v150 = vpack.c.b16 %v135, %v134
    %v151 = vpack.c.b16 %v137, %v136
    %v152 = vpack.c.b16 %v139, %v138
    %v153 = vpack.c.b16 %v141, %v140
    %v154 = vpack.c.b16 %v143, %v142
    %v155 = vpack.c.b16 %v145, %v144
    %v156 = vpack.c.b16 %v147, %v146
    %v157 = vpack.c.b16 %v149, %v148
    %166 = vmatpush.bf16.msra.mxu0 %v157
    %167 = vmatpush.bf16.msra.mxu0 %v156
    %168 = vmatpush.bf16.msra.mxu0 %v155
    %169 = vmatpush.bf16.msra.mxu0 %v154
    %170 = vmatpush.bf16.msra.mxu0 %v153
    %171 = vmatpush.bf16.msra.mxu0 %v152
    %172 = vmatpush.bf16.msra.mxu0 %v151
    %173 = vmatpush.bf16.msra.mxu0 %v150
    %174 = vmatmul.bf16.gmra.mxu0 %v116
    %v175 = vpop.f32.mrf.mxu0
    %v176 = vadd.f32 %v110, %v175
    %v177 = vpop.f32.mrf.mxu0
    %v178 = vadd.f32 %v110, %v177
    %179 = vdwg.mxu0
    %v180 = vmax.f32 %v176, 0.0
    %v181 = vmax.f32 %v178, 0.0
    %v182 = vpack.c.bf16 %v181, %v180
    %v183 = vld [vmem:[#allocation7] sm:$0xf]
    %v184 = vld [vmem:[#allocation7 + $0x4] sm:$0xf]
    %v185 = vld [vmem:[#allocation7 + $0x8] sm:$0xf]
    %v186 = vld [vmem:[#allocation7 + $0xc] sm:$0xf]
    %v187 = vld [vmem:[#allocation7 + $0x10] sm:$0xf]
    %v188 = vld [vmem:[#allocation7 + $0x14] sm:$0xf]
    %v189 = vld [vmem:[#allocation7 + $0x18] sm:$0xf]
    %v190 = vld [vmem:[#allocation7 + $0x1c] sm:$0xf]
    %v191 = vld [vmem:[#allocation7 + $0x20] sm:$0xf]
    %v192 = vld [vmem:[#allocation7 + $0x24] sm:$0xf]
    %v193 = vld [vmem:[#allocation7 + $0x28] sm:$0xf]
    %v194 = vld [vmem:[#allocation7 + $0x2c] sm:$0xf]
    %v195 = vld [vmem:[#allocation7 + $0x30] sm:$0xf]
    %v196 = vld [vmem:[#allocation7 + $0x34] sm:$0xf]
    %v197 = vld [vmem:[#allocation7 + $0x38] sm:$0xf]
    %v198 = vld [vmem:[#allocation7 + $0x3c] sm:$0xf]
    %v199 = vld [vmem:[%s4] sm:$0x1]
    %v201 = vperm.slane %v199, 0
    %v219 = vunpack.c.l.b16 %v183
    %v220 = vunpack.c.l.b16 %v184
    %v221 = vunpack.c.l.b16 %v185
    %v222 = vunpack.c.l.b16 %v186
    %v223 = vunpack.c.l.b16 %v187
    %v224 = vunpack.c.l.b16 %v188
    %v225 = vunpack.c.l.b16 %v189
    %v226 = vunpack.c.l.b16 %v190
    %v227 = vunpack.c.l.b16 %v191
    %v228 = vunpack.c.l.b16 %v192
    %v229 = vunpack.c.l.b16 %v193
    %v230 = vunpack.c.l.b16 %v194
    %v231 = vunpack.c.l.b16 %v195
    %v232 = vunpack.c.l.b16 %v196
    %v233 = vunpack.c.l.b16 %v197
    %v234 = vunpack.c.l.b16 %v198
    %v235 = vpack.c.b16 %v220, %v219
    %v236 = vpack.c.b16 %v222, %v221
    %v237 = vpack.c.b16 %v224, %v223
    %v238 = vpack.c.b16 %v226, %v225
    %v239 = vpack.c.b16 %v228, %v227
    %v240 = vpack.c.b16 %v230, %v229
    %v241 = vpack.c.b16 %v232, %v231
    %v242 = vpack.c.b16 %v234, %v233
    %251 = vmatpush.bf16.msra.mxu0 %v242
    %252 = vmatpush.bf16.msra.mxu0 %v241
    %253 = vmatpush.bf16.msra.mxu0 %v240
    %254 = vmatpush.bf16.msra.mxu0 %v239
    %255 = vmatpush.bf16.msra.mxu0 %v238
    %256 = vmatpush.bf16.msra.mxu0 %v237
    %257 = vmatpush.bf16.msra.mxu0 %v236
    %258 = vmatpush.bf16.msra.mxu0 %v235
    %259 = vmatmul.bf16.gmra.mxu0 %v182
    %v260 = vpop.f32.mrf.mxu0
    %v261 = vadd.f32 %v201, %v260
    %v262 = vpop.f32.mrf.mxu0
    %v263 = vadd.f32 %v201, %v262
    %264 = vdwg.mxu0
    %v265 = vadd.f32 %v261, %v263
    %v266 = vrot.slane %v265, 4
    %v267 = vadd.f32 %v265, %v266
    %v268 = vrot.slane %v267, 2
    %v269 = vadd.f32 %v267, %v268
    %v270 = vrot.slane %v269, 1
    %v271 = vadd.f32 %v269, %v270
    %v272 = vmul.f32 %v261, %v261
    %v273 = vmul.f32 %v263, %v263
    %v274 = vadd.f32 %v272, %v273
    %v275 = vrot.slane %v274, 4
    %v276 = vadd.f32 %v274, %v275
    %v277 = vrot.slane %v276, 2
    %v278 = vadd.f32 %v276, %v277
    %v279 = vrot.slane %v278, 1
    %v280 = vadd.f32 %v278, %v279
    %v281 = vmul.f32 %v271, 0.0625
    %v282 = vmul.f32 %v281, %v281
    %v283 = vmul.f32 %v282, 16.0
    %v284 = vsub.f32 %v280, %v283
    %v285 = vmul.f32 %v284, 0.06666667
    %v286 = vadd.f32 %v285, 1e-05
    %v287 = vrcp.pop %v286
    %v288 = vsub.f32 %v261, %v281
    %v289 = vsub.f32 %v263, %v281
    %v290 = vmul.f32 %v288, %v287
    %v291 = vmul.f32 %v289, %v287
    %v292 = vmax.f32 %v290, 0.0
    %v293 = vmax.f32 %v291, 0.0
    %v294 = vadd.f32 %v292, %v293
    %v295 = vrot.slane %v294, 4
    %v296 = vadd.f32 %v294, %v295
    %v297 = vrot.slane %v296, 2
    %v298 = vadd.f32 %v296, %v297
    %v299 = vrot.slane %v298, 1
    %v300 = vadd.f32 %v298, %v299
    %v301 = vmul.f32 %v292, %v292
    %v302 = vmul.f32 %v293, %v293
    %v303 = vadd.f32 %v301, %v302
    %v304 = vrot.slane %v303, 4
    %v305 = vadd.f32 %v303, %v304
    %v306 = vrot.slane %v305, 2
    %v307 = vadd.f32 %v305, %v306
    %v308 = vrot.slane %v307, 1
    %v309 = vadd.f32 %v307, %v308
    %v310 = vmul.f32 %v300, 0.0625
    %v311 = vmul.f32 %v310, %v310
    %v312 = vmul.f32 %v311, 16.0
    %v313 = vsub.f32 %v309, %v312
    %v314 = vmul.f32 %v313, 0.06666667
    %v315 = vadd.f32 %v314, 1e-05
    %v316 = vrcp.pop %v315
    %v317 = vsub.f32 %v292, %v310
    %v318 = vsub.f32 %v293, %v310
    %v319 = vmul.f32 %v317, %v316
    %v320 = vmul.f32 %v318, %v316
    %v321 = vpack.c.bf16 %v320, %v319
    %v322 = vld [vmem:[#allocation8] sm:$0xf]
    %v323 = vld [vmem:[#allocation8 + $0x4] sm:$0xf]
    %v324 = vld [vmem:[#allocation8 + $0x8] sm:$0xf]
    %v325 = vld [vmem:[#allocation8 + $0xc] sm:$0xf]
    %v326 = vld [vmem:[#allocation8 + $0x10] sm:$0xf]
    %v327 = vld [vmem:[#allocation8 + $0x14] sm:$0xf]
    %v328 = vld [vmem:[#allocation8 + $0x18] sm:$0xf]
    %v329 = vld [vmem:[#allocation8 + $0x1c] sm:$0xf]
    %v330 = vld [vmem:[#allocation8 + $0x20] sm:$0xf]
    %v331 = vld [vmem:[#allocation8 + $0x24] sm:$0xf]
    %v332 = vld [vmem:[#allocation8 + $0x28] sm:$0xf]
    %v333 = vld [vmem:[#allocation8 + $0x2c] sm:$0xf]
    %v334 = vld [vmem:[#allocation8 + $0x30] sm:$0xf]
    %v335 = vld [vmem:[#allocation8 + $0x34] sm:$0xf]
    %v336 = vld [vmem:[#allocation8 + $0x38] sm:$0xf]
    %v337 = vld [vmem:[#allocation8 + $0x3c] sm:$0xf]
    %v338 = vld [vmem:[%s6] sm:$0x1]
    %v340 = vperm.slane %v338, 0
    %v358 = vunpack.c.l.b16 %v322
    %v359 = vunpack.c.l.b16 %v323
    %v360 = vunpack.c.l.b16 %v324
    %v361 = vunpack.c.l.b16 %v325
    %v362 = vunpack.c.l.b16 %v326
    %v363 = vunpack.c.l.b16 %v327
    %v364 = vunpack.c.l.b16 %v328
    %v365 = vunpack.c.l.b16 %v329
    %v366 = vunpack.c.l.b16 %v330
    %v367 = vunpack.c.l.b16 %v331
    %v368 = vunpack.c.l.b16 %v332
    %v369 = vunpack.c.l.b16 %v333
    %v370 = vunpack.c.l.b16 %v334
    %v371 = vunpack.c.l.b16 %v335
    %v372 = vunpack.c.l.b16 %v336
    %v373 = vunpack.c.l.b16 %v337
    %v374 = vpack.c.b16 %v359, %v358
    %v375 = vpack.c.b16 %v361, %v360
    %v376 = vpack.c.b16 %v363, %v362
    %v377 = vpack.c.b16 %v365, %v364
    %v378 = vpack.c.b16 %v367, %v366
    %v379 = vpack.c.b16 %v369, %v368
    %v380 = vpack.c.b16 %v371, %v370
    %v381 = vpack.c.b16 %v373, %v372
    %390 = vmatpush.bf16.msra.mxu0 %v381
    %391 = vmatpush.bf16.msra.mxu0 %v380
    %392 = vmatpush.bf16.msra.mxu0 %v379
    %393 = vmatpush.bf16.msra.mxu0 %v378
    %394 = vmatpush.bf16.msra.mxu0 %v377
    %395 = vmatpush.bf16.msra.mxu0 %v376
    %396 = vmatpush.bf16.msra.mxu0 %v375
    %397 = vmatpush.bf16.msra.mxu0 %v374
    %398 = vmatmul.bf16.gmra.mxu0 %v321
    %v399 = vpop.f32.mrf.mxu0
    %v400 = vadd.f32 %v340, %v399
    %v401 = vpop.f32.mrf.mxu0
    %v402 = vadd.f32 %v340, %v401
    %403 = vdwg.mxu0
    %v404 = vmax.f32 %v400, 0.0
    %v405 = vmax.f32 %v402, 0.0
    %406 = vst [vmem:[#allocation10] sm:$0xff] %v404
    %407 = vst [vmem:[#allocation10 + $0x8] sm:$0xff] %v405
    // Predicated region
    $region46: #{tpu_custom_call.1} parent=1 // pred_check
      _
    $region47: #{tpu_custom_call.1} parent=1 // pred_check_branch
      %409 = sbr.rel (0) target = $region49
    $region48: #{tpu_custom_call.1} parent=1 // pred_region
      %411 = vsyncadd [#allocation4], 0
      %s412 = sshll.u32 [#allocation10], 4
      %s413 = int_to_ptr.vmem [resolvable:$true] %s412
      %s414 = sshll.u32 %s7, 4
      %s415 = int_to_ptr.hbm [resolvable:$true] %s414
      %420 = dma.vmem_to_hbm [thread:$0]  %s413, 256, %s415, [#allocation4], 128, 128, 8
    $region49: #{tpu_custom_call.1} parent=1 // pred_fallthru
      _
    // Predicated region
    $region50: #{tpu_custom_call.1} parent=1 // pred_check
      _
    $region51: #{tpu_custom_call.1} parent=1 // pred_check_branch
      %422 = sbr.rel (0) target = $region53
    $region52: #{tpu_custom_call.1} parent=1 // pred_region
      %424 = dma.done [#allocation4], 256
    $region53: #{tpu_custom_call.1} parent=1 // pred_fallthru
      _
    %425 = vsyncpa [#allocation3], 1
    %426 = vsyncpa [#allocation6], 1
    %427 = vsyncpa [#allocation9], 1
    %428 = vsyncpa [#allocation4], 1

</llo_original>
